<compile_context>
chip_gen: v5e
topology: v5e:2x2
jax: 0.10.0
libtpu: 0.0.40
codegen_flags: <defaults>
</compile_context>

<pallas_src>
import functools

import jax
import jax.numpy as jnp
from jax.experimental import pallas as pl
from jax.experimental.pallas import tpu as pltpu


def _wnconv2d_kernel(x_ref, w_ref, b_ref, o_ref, patch_ref, *, tH, Wo, KH, KW, Cin):
    """One (batch, row-tile) per grid step.

    x_ref:     (Cin, Hp, Wp)        whole padded image for this batch element
                                    (revisited across row tiles -> fetched once)
    w_ref:     (Cout, KH*KW*Cin)    normalized, im2col-ordered weights
    b_ref:     (Cout, 1)            bias
    o_ref:     (Cout, tH*Wo)        lane-dense output tile (flattened spatial)
    patch_ref: (KH*KW*Cin, tH*Wo)   VMEM scratch for the im2col patch
    """
    r = pl.program_id(1)
    row0 = pl.multiple_of(r * tH, tH)

    # Build the im2col patch once per tile.  Row order is (kh, kw, ci), which
    # matches the weight reshape done in the wrapper.
    for kh in range(KH):
        rows = x_ref[:, pl.ds(row0 + kh, tH), :]          # (Cin, tH, Wp)
        for kw in range(KW):
            slab = rows[:, :, kw:kw + Wo]                 # (Cin, tH, Wo), static slice
            t = kh * KW + kw
            patch_ref[t * Cin:(t + 1) * Cin, :] = (
                slab.reshape(Cin, tH * Wo).astype(jnp.float32))

    # Single MXU matmul per tile: (Cout, K) @ (K, tH*Wo); output is lane-dense.
    acc = jnp.dot(w_ref[...], patch_ref[...], preferred_element_type=jnp.float32)
    o_ref[...] = (acc + b_ref[...]).astype(o_ref.dtype)


def _pick_tile_rows(Ho, Wo):
    """Row-tile height tH (divisor of Ho) so the flattened output block tH*Wo
    is a multiple of 128 lanes, bounded in size, and there are >= 2 row tiles
    for pipelining; fall back to the whole output (always a legal block)."""
    candidates = [t for t in range(1, Ho)
                  if Ho % t == 0 and (t * Wo) % 128 == 0 and t * Wo <= 4096]
    return max(candidates) if candidates else Ho


def wn_conv2d(x_nchw, v, g, bias, *, padding):
    """Weight-normalized conv2d (stride=1, symmetric padding, NCHW in/out).

    x_nchw: (N, Cin, H, W)
    v:      (Cout, Cin, KH, KW)  direction parameter
    g:      (Cout,)              magnitude parameter
    bias:   (Cout,) or None
    """
    Cout, Cin, KH, KW = v.shape
    N, _, H, W = x_nchw.shape

    # --- weight norm (glue, plain JAX, done once per call) ---
    v32 = v.astype(jnp.float32)
    norm = jnp.sqrt(jnp.sum(v32 * v32, axis=(1, 2, 3), keepdims=True))  # (Cout,1,1,1)
    w = g.astype(jnp.float32).reshape(-1, 1, 1, 1) * v32 / norm         # (Cout,Cin,KH,KW)
    # im2col-ordered weight matrix: W[co, (kh*KW+kw)*Cin + ci] = w[co, ci, kh, kw]
    w_mat = jnp.transpose(w, (0, 2, 3, 1)).reshape(Cout, KH * KW * Cin)

    if bias is None:
        bias = jnp.zeros((Cout,), jnp.float32)
    b2 = bias.astype(jnp.float32).reshape(Cout, 1)

    # --- spatial padding (glue) ---
    # TODO(synk): fold the padding halo into the kernel (mask boundary taps) to
    # save one HBM round trip of the activation.
    xp = jnp.pad(x_nchw, ((0, 0), (0, 0), (padding, padding), (padding, padding)))
    Hp, Wp = H + 2 * padding, W + 2 * padding
    Ho, Wo = Hp - KH + 1, Wp - KW + 1
    K2C = KH * KW * Cin

    tH = _pick_tile_rows(Ho, Wo)
    n_row_tiles = Ho // tH

    kernel = functools.partial(
        _wnconv2d_kernel, tH=tH, Wo=Wo, KH=KH, KW=KW, Cin=Cin)

    cost = pl.CostEstimate(
        flops=2 * N * Ho * Wo * K2C * Cout,
        transcendentals=0,
        bytes_accessed=int((xp.size + w_mat.size + b2.size + N * Cout * Ho * Wo) * 4),
    )

    out_flat = pl.pallas_call(
        kernel,
        out_shape=jax.ShapeDtypeStruct((N, Cout, Ho * Wo), x_nchw.dtype),
        grid_spec=pltpu.PrefetchScalarGridSpec(
            num_scalar_prefetch=0,
            grid=(N, n_row_tiles),
            in_specs=[
                pl.BlockSpec((None, Cin, Hp, Wp), lambda n, r: (n, 0, 0, 0)),
                pl.BlockSpec((Cout, K2C), lambda n, r: (0, 0)),
                pl.BlockSpec((Cout, 1), lambda n, r: (0, 0)),
            ],
            out_specs=pl.BlockSpec((None, Cout, tH * Wo), lambda n, r: (n, 0, r)),
            scratch_shapes=[pltpu.VMEM((K2C, tH * Wo), jnp.float32)],
        ),
        compiler_params=pltpu.CompilerParams(
            dimension_semantics=("parallel", "arbitrary"),
            vmem_limit_bytes=48 * 1024 * 1024,
        ),
        cost_estimate=cost,
    )(xp, w_mat, b2)

    # Free-ish row-major reshape back to NCHW spatial layout.
    return out_flat.reshape(N, Cout, Ho, Wo)


if __name__ == "__main__":
    # Small, deterministic example consistent with the module:
    # in_channels=4, out_channels=8, kernel_size=3, padding=1, bias=True
    N, Cin, H, W = 2, 4, 16, 16
    Cout, K, P = 8, 3, 1

    key = jax.random.PRNGKey(0)
    kx, kv, kb = jax.random.split(key, 3)
    x = jax.random.normal(kx, (N, Cin, H, W), jnp.float32)
    v = jax.random.normal(kv, (Cout, Cin, K, K), jnp.float32) * 0.1
    # torch weight_norm init: g = ||v|| per output channel (so w == v at init)
    g = jnp.sqrt(jnp.sum(v * v, axis=(1, 2, 3)))
    b = jax.random.normal(kb, (Cout,), jnp.float32) * 0.01

    fn = jax.jit(wn_conv2d, static_argnames=("padding",))
    y = fn(x, v, g, b, padding=P)
    jax.block_until_ready(y)

    # Cross-check against XLA's conv (same math path, pure JAX reference).
    norm = jnp.sqrt(jnp.sum(v * v, axis=(1, 2, 3), keepdims=True))
    w_ref = g.reshape(-1, 1, 1, 1) * v / norm
    y_ref = jax.lax.conv_general_dilated(
        x, w_ref, window_strides=(1, 1), padding=[(P, P), (P, P)],
        dimension_numbers=("NCHW", "OIHW", "NCHW"),
    ) + b.reshape(1, Cout, 1, 1)
    assert y.shape == (N, Cout, H, W)
    assert jnp.allclose(y, y_ref, atol=1e-4, rtol=1e-4)

    print("KERNEL_OK")
</pallas_src>

<mosaic_0001>
module attributes {stable_mosaic.version = 11 : i64} {
  func.func @_wnconv2d_kernel(%arg0: i32, %arg1: i32, %arg2: memref<1x4x18x18xf32, #tpu.memory_space<vmem>>, %arg3: memref<8x36xf32, #tpu.memory_space<vmem>>, %arg4: memref<8x1xf32, #tpu.memory_space<vmem>>, %arg5: memref<1x8x128xf32, #tpu.memory_space<vmem>>, %arg6: memref<36x128xf32, #tpu.memory_space<vmem>>) attributes {dimension_semantics = [#tpu.dimension_semantics<parallel>, #tpu.dimension_semantics<arbitrary>], iteration_bounds = array<i64: 2, 2>, scalar_prefetch = 0 : i64, scratch_operands = 1 : i64, tpu.core_type = #tpu.core_type<tc>, window_params = [{transform_indices = @transform_0, window_bounds = array<i64: 1, 4, 18, 18>}, {pipeline_mode = #tpu.pipeline_mode<synchronous>, transform_indices = @transform_1, window_bounds = array<i64: 8, 36>}, {pipeline_mode = #tpu.pipeline_mode<synchronous>, transform_indices = @transform_2, window_bounds = array<i64: 8, 1>}, {transform_indices = @transform_3, window_bounds = array<i64: 1, 8, 128>}]} {
    %c8_i32 = arith.constant 8 : i32
    %0 = arith.muli %arg1, %c8_i32 : i32
    %1 = tpu.assume_multiple %0, 8 : i32
    %c0_i32 = arith.constant 0 : i32
    %2 = arith.addi %1, %c0_i32 : i32
    %c0 = arith.constant 0 : index
    %c0_0 = arith.constant 0 : index
    %3 = arith.index_cast %2 : i32 to index
    %c0_1 = arith.constant 0 : index
    %4 = vector.load %arg2[%c0, %c0_0, %3, %c0_1] : memref<1x4x18x18xf32, #tpu.memory_space<vmem>>, vector<1x4x8x18xf32>
    %5 = vector.shape_cast %4 : vector<1x4x8x18xf32> to vector<4x8x18xf32>
    %6 = vector.extract_strided_slice %5 {offsets = [0, 0, 0], sizes = [4, 8, 16], strides = [1, 1, 1]} : vector<4x8x18xf32> to vector<4x8x16xf32>
    %7 = vector.shape_cast %6 : vector<4x8x16xf32> to vector<4x128xf32>
    %c0_2 = arith.constant 0 : index
    %c0_3 = arith.constant 0 : index
    %8 = vector.load %arg6[%c0_2, %c0_3] : memref<36x128xf32, #tpu.memory_space<vmem>>, vector<4x128xf32>
    tpu.vector_store %arg6[%c0_2, %c0_3], %7 {strides = array<i32>} : memref<36x128xf32, #tpu.memory_space<vmem>>, vector<4x128xf32>,
    %9 = vector.extract_strided_slice %5 {offsets = [0, 0, 1], sizes = [4, 8, 16], strides = [1, 1, 1]} : vector<4x8x18xf32> to vector<4x8x16xf32>
    %10 = vector.shape_cast %9 : vector<4x8x16xf32> to vector<4x128xf32>
    %c4 = arith.constant 4 : index
    %c0_4 = arith.constant 0 : index
    %11 = vector.load %arg6[%c4, %c0_4] : memref<36x128xf32, #tpu.memory_space<vmem>>, vector<4x128xf32>
    tpu.vector_store %arg6[%c4, %c0_4], %10 {strides = array<i32>} : memref<36x128xf32, #tpu.memory_space<vmem>>, vector<4x128xf32>,
    %12 = vector.extract_strided_slice %5 {offsets = [0, 0, 2], sizes = [4, 8, 16], strides = [1, 1, 1]} : vector<4x8x18xf32> to vector<4x8x16xf32>
    %13 = vector.shape_cast %12 : vector<4x8x16xf32> to vector<4x128xf32>
    %c8 = arith.constant 8 : index
    %c0_5 = arith.constant 0 : index
    %14 = vector.load %arg6[%c8, %c0_5] : memref<36x128xf32, #tpu.memory_space<vmem>>, vector<4x128xf32>
    tpu.vector_store %arg6[%c8, %c0_5], %13 {strides = array<i32>} : memref<36x128xf32, #tpu.memory_space<vmem>>, vector<4x128xf32>,
    %c1_i32 = arith.constant 1 : i32
    %15 = arith.addi %1, %c1_i32 : i32
    %c0_6 = arith.constant 0 : index
    %c0_7 = arith.constant 0 : index
    %16 = arith.index_cast %15 : i32 to index
    %c0_8 = arith.constant 0 : index
    %17 = vector.load %arg2[%c0_6, %c0_7, %16, %c0_8] : memref<1x4x18x18xf32, #tpu.memory_space<vmem>>, vector<1x4x8x18xf32>
    %18 = vector.shape_cast %17 : vector<1x4x8x18xf32> to vector<4x8x18xf32>
    %19 = vector.extract_strided_slice %18 {offsets = [0, 0, 0], sizes = [4, 8, 16], strides = [1, 1, 1]} : vector<4x8x18xf32> to vector<4x8x16xf32>
    %20 = vector.shape_cast %19 : vector<4x8x16xf32> to vector<4x128xf32>
    %c12 = arith.constant 12 : index
    %c0_9 = arith.constant 0 : index
    %21 = vector.load %arg6[%c12, %c0_9] : memref<36x128xf32, #tpu.memory_space<vmem>>, vector<4x128xf32>
    tpu.vector_store %arg6[%c12, %c0_9], %20 {strides = array<i32>} : memref<36x128xf32, #tpu.memory_space<vmem>>, vector<4x128xf32>,
    %22 = vector.extract_strided_slice %18 {offsets = [0, 0, 1], sizes = [4, 8, 16], strides = [1, 1, 1]} : vector<4x8x18xf32> to vector<4x8x16xf32>
    %23 = vector.shape_cast %22 : vector<4x8x16xf32> to vector<4x128xf32>
    %c16 = arith.constant 16 : index
    %c0_10 = arith.constant 0 : index
    %24 = vector.load %arg6[%c16, %c0_10] : memref<36x128xf32, #tpu.memory_space<vmem>>, vector<4x128xf32>
    tpu.vector_store %arg6[%c16, %c0_10], %23 {strides = array<i32>} : memref<36x128xf32, #tpu.memory_space<vmem>>, vector<4x128xf32>,
    %25 = vector.extract_strided_slice %18 {offsets = [0, 0, 2], sizes = [4, 8, 16], strides = [1, 1, 1]} : vector<4x8x18xf32> to vector<4x8x16xf32>
    %26 = vector.shape_cast %25 : vector<4x8x16xf32> to vector<4x128xf32>
    %c20 = arith.constant 20 : index
    %c0_11 = arith.constant 0 : index
    %27 = vector.load %arg6[%c20, %c0_11] : memref<36x128xf32, #tpu.memory_space<vmem>>, vector<4x128xf32>
    tpu.vector_store %arg6[%c20, %c0_11], %26 {strides = array<i32>} : memref<36x128xf32, #tpu.memory_space<vmem>>, vector<4x128xf32>,
    %c2_i32 = arith.constant 2 : i32
    %28 = arith.addi %1, %c2_i32 : i32
    %c0_12 = arith.constant 0 : index
    %c0_13 = arith.constant 0 : index
    %29 = arith.index_cast %28 : i32 to index
    %c0_14 = arith.constant 0 : index
    %30 = vector.load %arg2[%c0_12, %c0_13, %29, %c0_14] : memref<1x4x18x18xf32, #tpu.memory_space<vmem>>, vector<1x4x8x18xf32>
    %31 = vector.shape_cast %30 : vector<1x4x8x18xf32> to vector<4x8x18xf32>
    %32 = vector.extract_strided_slice %31 {offsets = [0, 0, 0], sizes = [4, 8, 16], strides = [1, 1, 1]} : vector<4x8x18xf32> to vector<4x8x16xf32>
    %33 = vector.shape_cast %32 : vector<4x8x16xf32> to vector<4x128xf32>
    %c24 = arith.constant 24 : index
    %c0_15 = arith.constant 0 : index
    %34 = vector.load %arg6[%c24, %c0_15] : memref<36x128xf32, #tpu.memory_space<vmem>>, vector<4x128xf32>
    tpu.vector_store %arg6[%c24, %c0_15], %33 {strides = array<i32>} : memref<36x128xf32, #tpu.memory_space<vmem>>, vector<4x128xf32>,
    %35 = vector.extract_strided_slice %31 {offsets = [0, 0, 1], sizes = [4, 8, 16], strides = [1, 1, 1]} : vector<4x8x18xf32> to vector<4x8x16xf32>
    %36 = vector.shape_cast %35 : vector<4x8x16xf32> to vector<4x128xf32>
    %c28 = arith.constant 28 : index
    %c0_16 = arith.constant 0 : index
    %37 = vector.load %arg6[%c28, %c0_16] : memref<36x128xf32, #tpu.memory_space<vmem>>, vector<4x128xf32>
    tpu.vector_store %arg6[%c28, %c0_16], %36 {strides = array<i32>} : memref<36x128xf32, #tpu.memory_space<vmem>>, vector<4x128xf32>,
    %38 = vector.extract_strided_slice %31 {offsets = [0, 0, 2], sizes = [4, 8, 16], strides = [1, 1, 1]} : vector<4x8x18xf32> to vector<4x8x16xf32>
    %39 = vector.shape_cast %38 : vector<4x8x16xf32> to vector<4x128xf32>
    %c32 = arith.constant 32 : index
    %c0_17 = arith.constant 0 : index
    %40 = vector.load %arg6[%c32, %c0_17] : memref<36x128xf32, #tpu.memory_space<vmem>>, vector<4x128xf32>
    tpu.vector_store %arg6[%c32, %c0_17], %39 {strides = array<i32>} : memref<36x128xf32, #tpu.memory_space<vmem>>, vector<4x128xf32>,
    %c0_18 = arith.constant 0 : index
    %c0_19 = arith.constant 0 : index
    %41 = vector.load %arg3[%c0_18, %c0_19] : memref<8x36xf32, #tpu.memory_space<vmem>>, vector<8x36xf32>
    %c0_20 = arith.constant 0 : index
    %c0_21 = arith.constant 0 : index
    %42 = vector.load %arg6[%c0_20, %c0_21] : memref<36x128xf32, #tpu.memory_space<vmem>>, vector<36x128xf32>
    %cst = arith.constant dense<0.000000e+00> : vector<8x128xf32>
    %43 = tpu.matmul %41, %42, %cst {dimension_numbers = #tpu.dot_dimension_numbers<[1], [0], [0], [1], [0, 0, 1, 1], [], []>} : vector<8x36xf32>, vector<36x128xf32>, vector<8x128xf32> -> vector<8x128xf32>
    %c0_22 = arith.constant 0 : index
    %c0_23 = arith.constant 0 : index
    %44 = vector.load %arg4[%c0_22, %c0_23] : memref<8x1xf32, #tpu.memory_space<vmem>>, vector<8x1xf32>
    %45 = vector.broadcast %44 : vector<8x1xf32> to vector<8x128xf32>
    %46 = arith.addf %43, %45 : vector<8x128xf32>
    %c0_24 = arith.constant 0 : index
    %c0_25 = arith.constant 0 : index
    %c0_26 = arith.constant 0 : index
    %47 = vector.load %arg5[%c0_24, %c0_25, %c0_26] : memref<1x8x128xf32, #tpu.memory_space<vmem>>, vector<1x8x128xf32>
    %48 = vector.shape_cast %47 : vector<1x8x128xf32> to vector<8x128xf32>
    %49 = vector.shape_cast %46 : vector<8x128xf32> to vector<1x8x128xf32>
    tpu.vector_store %arg5[%c0_24, %c0_25, %c0_26], %49 {strides = array<i32>} : memref<1x8x128xf32, #tpu.memory_space<vmem>>, vector<1x8x128xf32>,
    return
  }
  func.func @transform_0(%arg0: i32, %arg1: i32) -> (i32, i32, i32, i32) {
    %c0_i32 = arith.constant 0 : i32
    %c0_i32_0 = arith.constant 0 : i32
    %c0_i32_1 = arith.constant 0 : i32
    %c0_i32_2 = arith.constant 0 : i32
    return %arg0, %c0_i32, %c0_i32_0, %c0_i32_1 : i32, i32, i32, i32
  }
  func.func @transform_1(%arg0: i32, %arg1: i32) -> (i32, i32) {
    %c0_i32 = arith.constant 0 : i32
    %c0_i32_0 = arith.constant 0 : i32
    %c0_i32_1 = arith.constant 0 : i32
    return %c0_i32, %c0_i32_0 : i32, i32
  }
  func.func @transform_2(%arg0: i32, %arg1: i32) -> (i32, i32) {
    %c0_i32 = arith.constant 0 : i32
    %c0_i32_0 = arith.constant 0 : i32
    %c0_i32_1 = arith.constant 0 : i32
    return %c0_i32, %c0_i32_0 : i32, i32
  }
  func.func @transform_3(%arg0: i32, %arg1: i32) -> (i32, i32, i32) {
    %c0_i32 = arith.constant 0 : i32
    %c0_i32_0 = arith.constant 0 : i32
    return %arg0, %c0_i32, %arg1 : i32, i32, i32
  }
}

</mosaic_0001>

<llo_original>
// kernel: wn_conv2d.1
$region0: #{wn_conv2d.1}
  #allocation0 [shape = 'u32[]', space=smem, size = 0x4, offset = 0x4, fixed_abs, tag = 'smem constant byte address 0x4 - core index']
  #allocation1 [shape = 'u32[72,128]{1,0:T(1,128)}', space=vmem, size = 0x9000, scoped, tag = 'internal scratch']
  #allocation2 [shape = 'f32[36,128]{1,0:T(8,128)}', space=vmem, size = 0x5000, scoped, tag = 'scratch operand']
  %s0 = inlined_call_operand.vmem [shape: f32[2,4,18,18], index: 0, kind: input, shape index: {}]
  %s1 = inlined_call_operand.vmem [shape: f32[8,36], index: 1, kind: input, shape index: {}]
  %s2 = inlined_call_operand.vmem [shape: f32[8,1], index: 2, kind: input, shape index: {}]
  %s3 = inlined_call_operand.vmem [shape: f32[2,8,256], index: 3, kind: output, shape index: {}]
  %s4 = sld [smem:[#allocation0]]
  $region45: #{wn_conv2d.1} parent=0
    _
  %s6 = ssub.s32 1, %s4
  %s7 = scalar_select 0, %s6, %s4
  loop: start=0, step=1, limit=6
  $region2: #{wn_conv2d.1} parent=0 // loop_pre_header
    _
  $region3: #{wn_conv2d.1} parent=0 // loop_header
    %s9 = sphi 0, %s13
    %p10 = scmp.ge.s32.totalorder %s9, 6
    %s16 = sphi 0, %s28
    %s17 = sphi 0, %s24
    %s18 = sphi 0, %s16
    %s19 = sphi 0, %s17
    %s20 = sphi 0, %s18
    %s21 = sphi 0, %s19
    %s31 = sphi 0, %s33
    %s34 = sphi 0, %s31
    %s35 = sphi 0, %s34
    %s51 = sphi 0, %s35
    %s55 = sphi 0, %s55
    %s57 = sphi 0, %s55
    %s58 = sphi 0, %s57
    %s72 = sphi 0, %s58
    %s76 = sphi 0, %s76
    %s78 = sphi 0, %s76
    %s79 = sphi 0, %s78
    %s93 = sphi 0, %s79
    %s101 = sphi 0, %s103
    %s104 = sphi 0, %s101
    %s105 = sphi 0, %s104
    %s121 = sphi 0, %s105
  $region4: #{wn_conv2d.1} parent=0 // loop_header_branch
    %12 = sbr.rel (%p10) target = $region8
  $region5: #{wn_conv2d.1} parent=0 // loop_body
    %s14 = ssub.s32 %s9, 1
    %s15 = ssub.s32 %s9, 2
    %s22 = sadd.s32 1, %s17
    %p23 = scmp.ge.s32.totalorder %s22, 2
    %s24 = scalar_select %p23, 0, %s22
    %s25 = sadd.s32 1, %s16
    %s26 = scalar_select %p23, %s25, %s16
    %p27 = scmp.ge.s32.totalorder %s26, 2
    %s28 = scalar_select %p27, 0, %s26
    %s29 = ssub.s32 %s16, %s28
    %p30 = scmp.eq.s32.totalorder %s29, 0
    %s32 = sadd.s32 %s31, 1
    %s33 = scalar_select %p30, %s31, %s32
    %p36 = pneg %p30
    %p37 = scmp.eq.s32.totalorder %s9, 3
    %p38 = por %p36, %p37
    %p39 = scmp.ne.s32.totalorder %s31, %s34
    %p40 = scmp.eq.s32.totalorder %s9, 0
    %p41 = por %p39, %p40
    %p42 = scmp.ne.s32.totalorder %s31, %s34
    %p43 = scmp.eq.s32.totalorder %s14, 3
    %p44 = por %p42, %p43
    %p45 = scmp.ne.s32.totalorder %s34, %s35
    %p46 = scmp.eq.s32.totalorder %s14, 0
    %p47 = por %p45, %p46
    %p48 = scmp.ne.s32.totalorder %s34, %s35
    %p49 = scmp.eq.s32.totalorder %s15, 3
    %p50 = por %p48, %p49
    %p52 = scmp.ne.s32.totalorder %s35, %s51
    %p53 = scmp.eq.s32.totalorder %s15, 0
    %p54 = por %p52, %p53
    %s56 = sadd.s32 %s55, 1
    %p59 = scmp.eq.s32.totalorder %s9, 3
    %p60 = scmp.ne.s32.totalorder %s55, %s57
    %p61 = scmp.eq.s32.totalorder %s9, 0
    %p62 = por %p60, %p61
    %p63 = scmp.ne.s32.totalorder %s55, %s57
    %p64 = scmp.eq.s32.totalorder %s14, 3
    %p65 = por %p63, %p64
    %p66 = scmp.ne.s32.totalorder %s57, %s58
    %p67 = scmp.eq.s32.totalorder %s14, 0
    %p68 = por %p66, %p67
    %p69 = scmp.ne.s32.totalorder %s57, %s58
    %p70 = scmp.eq.s32.totalorder %s15, 3
    %p71 = por %p69, %p70
    %p73 = scmp.ne.s32.totalorder %s58, %s72
    %p74 = scmp.eq.s32.totalorder %s15, 0
    %p75 = por %p73, %p74
    %s77 = sadd.s32 %s76, 1
    %p80 = scmp.eq.s32.totalorder %s9, 3
    %p81 = scmp.ne.s32.totalorder %s76, %s78
    %p82 = scmp.eq.s32.totalorder %s9, 0
    %p83 = por %p81, %p82
    %p84 = scmp.ne.s32.totalorder %s76, %s78
    %p85 = scmp.eq.s32.totalorder %s14, 3
    %p86 = por %p84, %p85
    %p87 = scmp.ne.s32.totalorder %s78, %s79
    %p88 = scmp.eq.s32.totalorder %s14, 0
    %p89 = por %p87, %p88
    %p90 = scmp.ne.s32.totalorder %s78, %s79
    %p91 = scmp.eq.s32.totalorder %s15, 3
    %p92 = por %p90, %p91
    %p94 = scmp.ne.s32.totalorder %s79, %s93
    %p95 = scmp.eq.s32.totalorder %s15, 0
    %p96 = por %p94, %p95
    %s97 = ssub.s32 %s16, %s28
    %s98 = ssub.s32 %s17, %s24
    %s99 = sor.u32 %s97, %s98
    %p100 = scmp.eq.s32.totalorder %s99, 0
    %s102 = sadd.s32 %s101, 1
    %s103 = scalar_select %p100, %s101, %s102
    %p106 = pneg %p100
    %p107 = scmp.eq.s32.totalorder %s9, 3
    %p108 = por %p106, %p107
    %p109 = scmp.ne.s32.totalorder %s101, %s104
    %p110 = scmp.eq.s32.totalorder %s9, 0
    %p111 = por %p109, %p110
    %p112 = scmp.ne.s32.totalorder %s101, %s104
    %p113 = scmp.eq.s32.totalorder %s14, 3
    %p114 = por %p112, %p113
    %p115 = scmp.ne.s32.totalorder %s104, %s105
    %p116 = scmp.eq.s32.totalorder %s14, 0
    %p117 = por %p115, %p116
    %p118 = scmp.ne.s32.totalorder %s104, %s105
    %p119 = scmp.eq.s32.totalorder %s15, 3
    %p120 = por %p118, %p119
    %p122 = scmp.ne.s32.totalorder %s105, %s121
    %p123 = scmp.eq.s32.totalorder %s15, 0
    %p124 = por %p122, %p123
    %p125 = scmp.le.s32.totalorder 1, %s9
    %p126 = scmp.lt.s32.totalorder %s9, 5
    %p127 = pnand %p125, %p126
    %p128 = pneg %p127
    // Predicated region
    $region9: #{wn_conv2d.1} parent=5 // pred_check
      _
    $region10: #{wn_conv2d.1} parent=5 // pred_check_branch
      %130 = sbr.rel (%p127) target = $region12
    $region11: #{wn_conv2d.1} parent=5 // pred_region
      %s131 = ssub.s32 %s9, 1
      // Predicated region
      $region13: #{wn_conv2d.1} parent=11 // pred_check
        %p132 = pneg %p68
      $region14: #{wn_conv2d.1} parent=11 // pred_check_branch
        %134 = sbr.rel (%p132) target = $region16
      $region15: #{wn_conv2d.1} parent=11 // pred_region
        _
      $region16: #{wn_conv2d.1} parent=11 // pred_fallthru
        _
      // Predicated region
      $region17: #{wn_conv2d.1} parent=11 // pred_check
        %p135 = pneg %p89
      $region18: #{wn_conv2d.1} parent=11 // pred_check_branch
        %137 = sbr.rel (%p135) target = $region20
      $region19: #{wn_conv2d.1} parent=11 // pred_region
        _
      $region20: #{wn_conv2d.1} parent=11 // pred_fallthru
        _
    $region12: #{wn_conv2d.1} parent=5 // pred_fallthru
      _
    %p138 = scmp.lt.s32.totalorder %s9, 4
    // Predicated region
    $region21: #{wn_conv2d.1} parent=5 // pred_check
      %p139 = pneg %p138
    $region22: #{wn_conv2d.1} parent=5 // pred_check_branch
      %141 = sbr.rel (%p139) target = $region24
    $region23: #{wn_conv2d.1} parent=5 // pred_region
      // Predicated region
      $region25: #{wn_conv2d.1} parent=23 // pred_check
        %p142 = pneg %p41
      $region26: #{wn_conv2d.1} parent=23 // pred_check_branch
        %144 = sbr.rel (%p142) target = $region28
      $region27: #{wn_conv2d.1} parent=23 // pred_region
        %p145 = scmp.lt.s32.totalorder %s16, 1
        %s146 = scalar_select %p145, %s16, 1
        %s147 = smul.addr %s146, 12
        %s148 = smul.addr %s147, 8
        %s149 = scalar_lea.vmem %s0, %s148
      $region28: #{wn_conv2d.1} parent=23 // pred_fallthru
        _
    $region24: #{wn_conv2d.1} parent=5 // pred_fallthru
      _
    %p150 = scmp.le.s32.totalorder 1, %s9
    %p151 = scmp.lt.s32.totalorder %s9, 5
    %p152 = pnand %p150, %p151
    %p153 = pneg %p152
    // Predicated region
    $region29: #{wn_conv2d.1} parent=5 // pred_check
      _
    $region30: #{wn_conv2d.1} parent=5 // pred_check_branch
      %155 = sbr.rel (%p152) target = $region32
    $region31: #{wn_conv2d.1} parent=5 // pred_region
      %s156 = ssub.s32 %s9, 1
      %p157 = scmp.lt.s32.totalorder %s18, 1
      %s158 = scalar_select %p157, %s18, 1
      %s159 = smul.addr %s158, 12
      %s160 = smul.addr %s159, 8
      %s161 = scalar_lea.vmem %s0, %s160
      %p162 = pneg %p47
      %p163 = pneg %p44
      %p164 = pneg %p68
      %p165 = pneg %p65
      %p166 = pneg %p89
      %p167 = pneg %p86
      %p168 = pneg %p117
      %p169 = pneg %p114
      %p170 = scmp.lt.s32.totalorder %s18, 1
      %s171 = scalar_select %p170, %s18, 1
      %p172 = scmp.lt.s32.totalorder %s19, 1
      %s173 = scalar_select %p172, %s19, 1
      %s174 = smul.addr %s171, 2
      %s175 = sadd.s32 %s173, %s174
      %s176 = smul.addr %s175, 8
      %s177 = scalar_lea.vmem %s3, %s176
      %p178 = scmp.lt.s32.totalorder %s18, 1
      %s179 = scalar_select %p178, %s18, 1
      %s180 = smul.addr %s179, 12
      %s181 = smul.addr %s180, 8
      %s182 = scalar_lea.vmem %s0, %s181
      %p183 = scmp.lt.s32.totalorder %s18, 1
      %s184 = scalar_select %p183, %s18, 1
      %p185 = scmp.lt.s32.totalorder %s19, 1
      %s186 = scalar_select %p185, %s19, 1
      %s187 = smul.addr %s184, 2
      %s188 = sadd.s32 %s186, %s187
      %s189 = smul.addr %s188, 8
      %s190 = scalar_lea.vmem %s3, %s189
      %s191 = smul.u32 %s19, 8
      %s192 = scalar_lea.vmem %s182, %s191
      %v193 = vld [vmem:[%s192] sm:$0xff]
      %v194 = vld [vmem:[%s192 + $0x18] sm:$0xff]
      %v195 = vld [vmem:[%s192 + $0x30] sm:$0xff]
      %v196 = vld [vmem:[%s192 + $0x48] sm:$0xff]
      %v197 = vrot.slane %v195, 4
      %vm198 = vcmask 1047556
      %v199 = vsel %vm198, %v197, %v193
      %v200 = vrot.slane %v193, 4
      %v201 = vsel %vm198, %v195, %v200
      %v203 = vunpack.c.l.s4 1983009808
      %v204 = vunpack.c.0.s8 %v203
      %v205 = vperm.slane %v199, %v204
      %v207 = vunpack.c.l.s4 1983009808
      %v208 = vunpack.c.0.s8 %v207
      %v209 = vperm.slane %v201, %v208
      %v210 = vrot.slane %v196, 4
      %v211 = vsel %vm198, %v210, %v194
      %v212 = vrot.slane %v194, 4
      %v213 = vsel %vm198, %v196, %v212
      %v215 = vunpack.c.l.s4 1983009808
      %v216 = vunpack.c.0.s8 %v215
      %v217 = vperm.slane %v211, %v216
      %v219 = vunpack.c.l.s4 1983009808
      %v220 = vunpack.c.0.s8 %v219
      %v221 = vperm.slane %v213, %v220
      %v222 = vrot.slane %v217, 4
      %v223 = vsel %vm198, %v222, %v205
      %v224 = vrot.slane %v205, 4
      %v225 = vsel %vm198, %v217, %v224
      %v227 = vunpack.c.l.s4 1934713408
      %v228 = vunpack.c.0.s8 %v227
      %v229 = vperm.slane %v223, %v228
      %v231 = vunpack.c.l.s4 1934713408
      %v232 = vunpack.c.0.s8 %v231
      %v233 = vperm.slane %v225, %v232
      %v234 = vrot.slane %v221, 4
      %v235 = vsel %vm198, %v234, %v209
      %v236 = vrot.slane %v209, 4
      %v237 = vsel %vm198, %v221, %v236
      %v239 = vunpack.c.l.s4 1934713408
      %v240 = vunpack.c.0.s8 %v239
      %v241 = vperm.slane %v235, %v240
      %v243 = vunpack.c.l.s4 1934713408
      %v244 = vunpack.c.0.s8 %v243
      %v245 = vperm.slane %v237, %v244
      %v246 = vrot.slane %v229, 4
      %v247 = vsel %vm198, 0.0, %v246
      %v248 = vrot.slane %v233, 4
      %v249 = vsel %vm198, 0.0, %v248
      %v250 = vrot.slane %v241, 4
      %v251 = vsel %vm198, 0.0, %v250
      %v252 = vrot.slane %v245, 4
      %v253 = vsel %vm198, 0.0, %v252
      %255 = vrot.lane.b32.xlu0 %v247, 16
      %v256 = vpop.permute.xlu0 %255
      %259 = vrot.lane.b32.xlu0 %v233, 32
      %v260 = vpop.permute.xlu0 %259
      %263 = vrot.lane.b32.xlu0 %v249, 48
      %v264 = vpop.permute.xlu0 %263
      %267 = vrot.lane.b32.xlu0 %v241, 64
      %v268 = vpop.permute.xlu0 %267
      %271 = vrot.lane.b32.xlu0 %v251, 80
      %v272 = vpop.permute.xlu0 %271
      %275 = vrot.lane.b32.xlu0 %v245, 96
      %v276 = vpop.permute.xlu0 %275
      %279 = vrot.lane.b32.xlu0 %v253, 112
      %v280 = vpop.permute.xlu0 %279
      %vm282 = vcmask 130048
      %v283 = vsel %vm282, %v229, %v256
      %vm284 = vcmask 261120
      %v285 = vsel %vm284, %v283, %v260
      %vm286 = vcmask 392192
      %v287 = vsel %vm286, %v285, %v264
      %vm288 = vcmask 523264
      %v289 = vsel %vm288, %v287, %v268
      %vm290 = vcmask 654336
      %v291 = vsel %vm290, %v289, %v272
      %vm292 = vcmask 785408
      %v293 = vsel %vm292, %v291, %v276
      %vm294 = vcmask 916480
      %v295 = vsel %vm294, %v293, %v280
      %296 = vst [vmem:[#allocation2] sm:$0xf] %v295
      %301 = vrot.lane.b32.xlu0 %v193, 127
      %v302 = vpop.permute.xlu0 %301
      %303 = vrot.lane.b32.xlu0 %v194, 127
      %v304 = vpop.permute.xlu0 %303
      %305 = vrot.lane.b32.xlu0 %v195, 127
      %v306 = vpop.permute.xlu0 %305
      %307 = vrot.lane.b32.xlu0 %v196, 127
      %v308 = vpop.permute.xlu0 %307
      %v313 = vrot.slane %v306, 4
      %v314 = vsel %vm198, %v313, %v302
      %v315 = vrot.slane %v302, 4
      %v316 = vsel %vm198, %v306, %v315
      %v318 = vunpack.c.l.s4 1983009808
      %v319 = vunpack.c.0.s8 %v318
      %v320 = vperm.slane %v314, %v319
      %v322 = vunpack.c.l.s4 1983009808
      %v323 = vunpack.c.0.s8 %v322
      %v324 = vperm.slane %v316, %v323
      %v325 = vrot.slane %v308, 4
      %v326 = vsel %vm198, %v325, %v304
      %v327 = vrot.slane %v304, 4
      %v328 = vsel %vm198, %v308, %v327
      %v330 = vunpack.c.l.s4 1983009808
      %v331 = vunpack.c.0.s8 %v330
      %v332 = vperm.slane %v326, %v331
      %v334 = vunpack.c.l.s4 1983009808
      %v335 = vunpack.c.0.s8 %v334
      %v336 = vperm.slane %v328, %v335
      %v337 = vrot.slane %v332, 4
      %v338 = vsel %vm198, %v337, %v320
      %v339 = vrot.slane %v320, 4
      %v340 = vsel %vm198, %v332, %v339
      %v342 = vunpack.c.l.s4 1934713408
      %v343 = vunpack.c.0.s8 %v342
      %v344 = vperm.slane %v338, %v343
      %v346 = vunpack.c.l.s4 1934713408
      %v347 = vunpack.c.0.s8 %v346
      %v348 = vperm.slane %v340, %v347
      %v349 = vrot.slane %v336, 4
      %v350 = vsel %vm198, %v349, %v324
      %v351 = vrot.slane %v324, 4
      %v352 = vsel %vm198, %v336, %v351
      %v354 = vunpack.c.l.s4 1934713408
      %v355 = vunpack.c.0.s8 %v354
      %v356 = vperm.slane %v350, %v355
      %v358 = vunpack.c.l.s4 1934713408
      %v359 = vunpack.c.0.s8 %v358
      %v360 = vperm.slane %v352, %v359
      %v361 = vrot.slane %v344, 4
      %v362 = vsel %vm198, 0.0, %v361
      %v363 = vrot.slane %v348, 4
      %v364 = vsel %vm198, 0.0, %v363
      %v365 = vrot.slane %v356, 4
      %v366 = vsel %vm198, 0.0, %v365
      %v367 = vrot.slane %v360, 4
      %v368 = vsel %vm198, 0.0, %v367
      %370 = vrot.lane.b32.xlu0 %v362, 16
      %v371 = vpop.permute.xlu0 %370
      %374 = vrot.lane.b32.xlu0 %v348, 32
      %v375 = vpop.permute.xlu0 %374
      %378 = vrot.lane.b32.xlu0 %v364, 48
      %v379 = vpop.permute.xlu0 %378
      %382 = vrot.lane.b32.xlu0 %v356, 64
      %v383 = vpop.permute.xlu0 %382
      %386 = vrot.lane.b32.xlu0 %v366, 80
      %v387 = vpop.permute.xlu0 %386
      %390 = vrot.lane.b32.xlu0 %v360, 96
      %v391 = vpop.permute.xlu0 %390
      %394 = vrot.lane.b32.xlu0 %v368, 112
      %v395 = vpop.permute.xlu0 %394
      %v397 = vsel %vm282, %v344, %v371
      %v398 = vsel %vm284, %v397, %v375
      %v399 = vsel %vm286, %v398, %v379
      %v400 = vsel %vm288, %v399, %v383
      %v401 = vsel %vm290, %v400, %v387
      %v402 = vsel %vm292, %v401, %v391
      %v403 = vsel %vm294, %v402, %v395
      %404 = vst [vmem:[#allocation2 + $0x4] sm:$0xf] %v403
      %405 = vrot.lane.b32.xlu0 %v193, 126
      %v406 = vpop.permute.xlu0 %405
      %407 = vrot.lane.b32.xlu0 %v194, 126
      %v408 = vpop.permute.xlu0 %407
      %409 = vrot.lane.b32.xlu0 %v195, 126
      %v410 = vpop.permute.xlu0 %409
      %411 = vrot.lane.b32.xlu0 %v196, 126
      %v412 = vpop.permute.xlu0 %411
      %v417 = vrot.slane %v410, 4
      %v418 = vsel %vm198, %v417, %v406
      %v419 = vrot.slane %v406, 4
      %v420 = vsel %vm198, %v410, %v419
      %v422 = vunpack.c.l.s4 1983009808
      %v423 = vunpack.c.0.s8 %v422
      %v424 = vperm.slane %v418, %v423
      %v426 = vunpack.c.l.s4 1983009808
      %v427 = vunpack.c.0.s8 %v426
      %v428 = vperm.slane %v420, %v427
      %v429 = vrot.slane %v412, 4
      %v430 = vsel %vm198, %v429, %v408
      %v431 = vrot.slane %v408, 4
      %v432 = vsel %vm198, %v412, %v431
      %v434 = vunpack.c.l.s4 1983009808
      %v435 = vunpack.c.0.s8 %v434
      %v436 = vperm.slane %v430, %v435
      %v438 = vunpack.c.l.s4 1983009808
      %v439 = vunpack.c.0.s8 %v438
      %v440 = vperm.slane %v432, %v439
      %v441 = vrot.slane %v436, 4
      %v442 = vsel %vm198, %v441, %v424
      %v443 = vrot.slane %v424, 4
      %v444 = vsel %vm198, %v436, %v443
      %v446 = vunpack.c.l.s4 1934713408
      %v447 = vunpack.c.0.s8 %v446
      %v448 = vperm.slane %v442, %v447
      %v450 = vunpack.c.l.s4 1934713408
      %v451 = vunpack.c.0.s8 %v450
      %v452 = vperm.slane %v444, %v451
      %v453 = vrot.slane %v440, 4
      %v454 = vsel %vm198, %v453, %v428
      %v455 = vrot.slane %v428, 4
      %v456 = vsel %vm198, %v440, %v455
      %v458 = vunpack.c.l.s4 1934713408
      %v459 = vunpack.c.0.s8 %v458
      %v460 = vperm.slane %v454, %v459
      %v462 = vunpack.c.l.s4 1934713408
      %v463 = vunpack.c.0.s8 %v462
      %v464 = vperm.slane %v456, %v463
      %v465 = vrot.slane %v448, 4
      %v466 = vsel %vm198, 0.0, %v465
      %v467 = vrot.slane %v452, 4
      %v468 = vsel %vm198, 0.0, %v467
      %v469 = vrot.slane %v460, 4
      %v470 = vsel %vm198, 0.0, %v469
      %v471 = vrot.slane %v464, 4
      %v472 = vsel %vm198, 0.0, %v471
      %474 = vrot.lane.b32.xlu0 %v466, 16
      %v475 = vpop.permute.xlu0 %474
      %478 = vrot.lane.b32.xlu0 %v452, 32
      %v479 = vpop.permute.xlu0 %478
      %482 = vrot.lane.b32.xlu0 %v468, 48
      %v483 = vpop.permute.xlu0 %482
      %486 = vrot.lane.b32.xlu0 %v460, 64
      %v487 = vpop.permute.xlu0 %486
      %490 = vrot.lane.b32.xlu0 %v470, 80
      %v491 = vpop.permute.xlu0 %490
      %494 = vrot.lane.b32.xlu0 %v464, 96
      %v495 = vpop.permute.xlu0 %494
      %498 = vrot.lane.b32.xlu0 %v472, 112
      %v499 = vpop.permute.xlu0 %498
      %v501 = vsel %vm282, %v448, %v475
      %v502 = vsel %vm284, %v501, %v479
      %v503 = vsel %vm286, %v502, %v483
      %v504 = vsel %vm288, %v503, %v487
      %v505 = vsel %vm290, %v504, %v491
      %v506 = vsel %vm292, %v505, %v495
      %v507 = vsel %vm294, %v506, %v499
      %508 = vst [vmem:[#allocation2 + $0x8] sm:$0xf] %v507
      %s509 = sadd.s32 %s191, 1
      %s510 = scalar_lea.vmem %s182, %s509
      %v511 = vld [vmem:[%s510] sm:$0xff]
      %v512 = vld [vmem:[%s510 + $0x18] sm:$0xff]
      %v513 = vld [vmem:[%s510 + $0x30] sm:$0xff]
      %v514 = vld [vmem:[%s510 + $0x48] sm:$0xff]
      %v515 = vrot.slane %v513, 4
      %v516 = vsel %vm198, %v515, %v511
      %v517 = vrot.slane %v511, 4
      %v518 = vsel %vm198, %v513, %v517
      %v520 = vunpack.c.l.s4 1983009808
      %v521 = vunpack.c.0.s8 %v520
      %v522 = vperm.slane %v516, %v521
      %v524 = vunpack.c.l.s4 1983009808
      %v525 = vunpack.c.0.s8 %v524
      %v526 = vperm.slane %v518, %v525
      %v527 = vrot.slane %v514, 4
      %v528 = vsel %vm198, %v527, %v512
      %v529 = vrot.slane %v512, 4
      %v530 = vsel %vm198, %v514, %v529
      %v532 = vunpack.c.l.s4 1983009808
      %v533 = vunpack.c.0.s8 %v532
      %v534 = vperm.slane %v528, %v533
      %v536 = vunpack.c.l.s4 1983009808
      %v537 = vunpack.c.0.s8 %v536
      %v538 = vperm.slane %v530, %v537
      %v539 = vrot.slane %v534, 4
      %v540 = vsel %vm198, %v539, %v522
      %v541 = vrot.slane %v522, 4
      %v542 = vsel %vm198, %v534, %v541
      %v544 = vunpack.c.l.s4 1934713408
      %v545 = vunpack.c.0.s8 %v544
      %v546 = vperm.slane %v540, %v545
      %v548 = vunpack.c.l.s4 1934713408
      %v549 = vunpack.c.0.s8 %v548
      %v550 = vperm.slane %v542, %v549
      %v551 = vrot.slane %v538, 4
      %v552 = vsel %vm198, %v551, %v526
      %v553 = vrot.slane %v526, 4
      %v554 = vsel %vm198, %v538, %v553
      %v556 = vunpack.c.l.s4 1934713408
      %v557 = vunpack.c.0.s8 %v556
      %v558 = vperm.slane %v552, %v557
      %v560 = vunpack.c.l.s4 1934713408
      %v561 = vunpack.c.0.s8 %v560
      %v562 = vperm.slane %v554, %v561
      %v563 = vrot.slane %v546, 4
      %v564 = vsel %vm198, 0.0, %v563
      %v565 = vrot.slane %v550, 4
      %v566 = vsel %vm198, 0.0, %v565
      %v567 = vrot.slane %v558, 4
      %v568 = vsel %vm198, 0.0, %v567
      %v569 = vrot.slane %v562, 4
      %v570 = vsel %vm198, 0.0, %v569
      %572 = vrot.lane.b32.xlu0 %v564, 16
      %v573 = vpop.permute.xlu0 %572
      %576 = vrot.lane.b32.xlu0 %v550, 32
      %v577 = vpop.permute.xlu0 %576
      %580 = vrot.lane.b32.xlu0 %v566, 48
      %v581 = vpop.permute.xlu0 %580
      %584 = vrot.lane.b32.xlu0 %v558, 64
      %v585 = vpop.permute.xlu0 %584
      %588 = vrot.lane.b32.xlu0 %v568, 80
      %v589 = vpop.permute.xlu0 %588
      %592 = vrot.lane.b32.xlu0 %v562, 96
      %v593 = vpop.permute.xlu0 %592
      %596 = vrot.lane.b32.xlu0 %v570, 112
      %v597 = vpop.permute.xlu0 %596
      %v599 = vsel %vm282, %v546, %v573
      %v600 = vsel %vm284, %v599, %v577
      %v601 = vsel %vm286, %v600, %v581
      %v602 = vsel %vm288, %v601, %v585
      %v603 = vsel %vm290, %v602, %v589
      %v604 = vsel %vm292, %v603, %v593
      %v605 = vsel %vm294, %v604, %v597
      %606 = vst [vmem:[#allocation2 + $0xc] sm:$0xf] %v605
      %611 = vrot.lane.b32.xlu0 %v511, 127
      %v612 = vpop.permute.xlu0 %611
      %613 = vrot.lane.b32.xlu0 %v512, 127
      %v614 = vpop.permute.xlu0 %613
      %615 = vrot.lane.b32.xlu0 %v513, 127
      %v616 = vpop.permute.xlu0 %615
      %617 = vrot.lane.b32.xlu0 %v514, 127
      %v618 = vpop.permute.xlu0 %617
      %v623 = vrot.slane %v616, 4
      %v624 = vsel %vm198, %v623, %v612
      %v625 = vrot.slane %v612, 4
      %v626 = vsel %vm198, %v616, %v625
      %v628 = vunpack.c.l.s4 1983009808
      %v629 = vunpack.c.0.s8 %v628
      %v630 = vperm.slane %v624, %v629
      %v632 = vunpack.c.l.s4 1983009808
      %v633 = vunpack.c.0.s8 %v632
      %v634 = vperm.slane %v626, %v633
      %v635 = vrot.slane %v618, 4
      %v636 = vsel %vm198, %v635, %v614
      %v637 = vrot.slane %v614, 4
      %v638 = vsel %vm198, %v618, %v637
      %v640 = vunpack.c.l.s4 1983009808
      %v641 = vunpack.c.0.s8 %v640
      %v642 = vperm.slane %v636, %v641
      %v644 = vunpack.c.l.s4 1983009808
      %v645 = vunpack.c.0.s8 %v644
      %v646 = vperm.slane %v638, %v645
      %v647 = vrot.slane %v642, 4
      %v648 = vsel %vm198, %v647, %v630
      %v649 = vrot.slane %v630, 4
      %v650 = vsel %vm198, %v642, %v649
      %v652 = vunpack.c.l.s4 1934713408
      %v653 = vunpack.c.0.s8 %v652
      %v654 = vperm.slane %v648, %v653
      %v656 = vunpack.c.l.s4 1934713408
      %v657 = vunpack.c.0.s8 %v656
      %v658 = vperm.slane %v650, %v657
      %v659 = vrot.slane %v646, 4
      %v660 = vsel %vm198, %v659, %v634
      %v661 = vrot.slane %v634, 4
      %v662 = vsel %vm198, %v646, %v661
      %v664 = vunpack.c.l.s4 1934713408
      %v665 = vunpack.c.0.s8 %v664
      %v666 = vperm.slane %v660, %v665
      %v668 = vunpack.c.l.s4 1934713408
      %v669 = vunpack.c.0.s8 %v668
      %v670 = vperm.slane %v662, %v669
      %v671 = vrot.slane %v654, 4
      %v672 = vsel %vm198, 0.0, %v671
      %v673 = vrot.slane %v658, 4
      %v674 = vsel %vm198, 0.0, %v673
      %v675 = vrot.slane %v666, 4
      %v676 = vsel %vm198, 0.0, %v675
      %v677 = vrot.slane %v670, 4
      %v678 = vsel %vm198, 0.0, %v677
      %680 = vrot.lane.b32.xlu0 %v672, 16
      %v681 = vpop.permute.xlu0 %680
      %684 = vrot.lane.b32.xlu0 %v658, 32
      %v685 = vpop.permute.xlu0 %684
      %688 = vrot.lane.b32.xlu0 %v674, 48
      %v689 = vpop.permute.xlu0 %688
      %692 = vrot.lane.b32.xlu0 %v666, 64
      %v693 = vpop.permute.xlu0 %692
      %696 = vrot.lane.b32.xlu0 %v676, 80
      %v697 = vpop.permute.xlu0 %696
      %700 = vrot.lane.b32.xlu0 %v670, 96
      %v701 = vpop.permute.xlu0 %700
      %704 = vrot.lane.b32.xlu0 %v678, 112
      %v705 = vpop.permute.xlu0 %704
      %v707 = vsel %vm282, %v654, %v681
      %v708 = vsel %vm284, %v707, %v685
      %v709 = vsel %vm286, %v708, %v689
      %v710 = vsel %vm288, %v709, %v693
      %v711 = vsel %vm290, %v710, %v697
      %v712 = vsel %vm292, %v711, %v701
      %v713 = vsel %vm294, %v712, %v705
      %714 = vst [vmem:[#allocation2 + $0x10] sm:$0xf] %v713
      %715 = vrot.lane.b32.xlu0 %v511, 126
      %v716 = vpop.permute.xlu0 %715
      %717 = vrot.lane.b32.xlu0 %v512, 126
      %v718 = vpop.permute.xlu0 %717
      %719 = vrot.lane.b32.xlu0 %v513, 126
      %v720 = vpop.permute.xlu0 %719
      %721 = vrot.lane.b32.xlu0 %v514, 126
      %v722 = vpop.permute.xlu0 %721
      %v727 = vrot.slane %v720, 4
      %v728 = vsel %vm198, %v727, %v716
      %v729 = vrot.slane %v716, 4
      %v730 = vsel %vm198, %v720, %v729
      %v732 = vunpack.c.l.s4 1983009808
      %v733 = vunpack.c.0.s8 %v732
      %v734 = vperm.slane %v728, %v733
      %v736 = vunpack.c.l.s4 1983009808
      %v737 = vunpack.c.0.s8 %v736
      %v738 = vperm.slane %v730, %v737
      %v739 = vrot.slane %v722, 4
      %v740 = vsel %vm198, %v739, %v718
      %v741 = vrot.slane %v718, 4
      %v742 = vsel %vm198, %v722, %v741
      %v744 = vunpack.c.l.s4 1983009808
      %v745 = vunpack.c.0.s8 %v744
      %v746 = vperm.slane %v740, %v745
      %v748 = vunpack.c.l.s4 1983009808
      %v749 = vunpack.c.0.s8 %v748
      %v750 = vperm.slane %v742, %v749
      %v751 = vrot.slane %v746, 4
      %v752 = vsel %vm198, %v751, %v734
      %v753 = vrot.slane %v734, 4
      %v754 = vsel %vm198, %v746, %v753
      %v756 = vunpack.c.l.s4 1934713408
      %v757 = vunpack.c.0.s8 %v756
      %v758 = vperm.slane %v752, %v757
      %v760 = vunpack.c.l.s4 1934713408
      %v761 = vunpack.c.0.s8 %v760
      %v762 = vperm.slane %v754, %v761
      %v763 = vrot.slane %v750, 4
      %v764 = vsel %vm198, %v763, %v738
      %v765 = vrot.slane %v738, 4
      %v766 = vsel %vm198, %v750, %v765
      %v768 = vunpack.c.l.s4 1934713408
      %v769 = vunpack.c.0.s8 %v768
      %v770 = vperm.slane %v764, %v769
      %v772 = vunpack.c.l.s4 1934713408
      %v773 = vunpack.c.0.s8 %v772
      %v774 = vperm.slane %v766, %v773
      %v775 = vrot.slane %v758, 4
      %v776 = vsel %vm198, 0.0, %v775
      %v777 = vrot.slane %v762, 4
      %v778 = vsel %vm198, 0.0, %v777
      %v779 = vrot.slane %v770, 4
      %v780 = vsel %vm198, 0.0, %v779
      %v781 = vrot.slane %v774, 4
      %v782 = vsel %vm198, 0.0, %v781
      %784 = vrot.lane.b32.xlu0 %v776, 16
      %v785 = vpop.permute.xlu0 %784
      %788 = vrot.lane.b32.xlu0 %v762, 32
      %v789 = vpop.permute.xlu0 %788
      %792 = vrot.lane.b32.xlu0 %v778, 48
      %v793 = vpop.permute.xlu0 %792
      %796 = vrot.lane.b32.xlu0 %v770, 64
      %v797 = vpop.permute.xlu0 %796
      %800 = vrot.lane.b32.xlu0 %v780, 80
      %v801 = vpop.permute.xlu0 %800
      %804 = vrot.lane.b32.xlu0 %v774, 96
      %v805 = vpop.permute.xlu0 %804
      %808 = vrot.lane.b32.xlu0 %v782, 112
      %v809 = vpop.permute.xlu0 %808
      %v811 = vsel %vm282, %v758, %v785
      %v812 = vsel %vm284, %v811, %v789
      %v813 = vsel %vm286, %v812, %v793
      %v814 = vsel %vm288, %v813, %v797
      %v815 = vsel %vm290, %v814, %v801
      %v816 = vsel %vm292, %v815, %v805
      %v817 = vsel %vm294, %v816, %v809
      %818 = vst [vmem:[#allocation2 + $0x14] sm:$0xf] %v817
      %s819 = sadd.s32 %s191, 2
      %s820 = scalar_lea.vmem %s182, %s819
      %v821 = vld [vmem:[%s820] sm:$0xff]
      %v822 = vld [vmem:[%s820 + $0x18] sm:$0xff]
      %v823 = vld [vmem:[%s820 + $0x30] sm:$0xff]
      %v824 = vld [vmem:[%s820 + $0x48] sm:$0xff]
      %v825 = vrot.slane %v823, 4
      %v826 = vsel %vm198, %v825, %v821
      %v827 = vrot.slane %v821, 4
      %v828 = vsel %vm198, %v823, %v827
      %v830 = vunpack.c.l.s4 1983009808
      %v831 = vunpack.c.0.s8 %v830
      %v832 = vperm.slane %v826, %v831
      %v834 = vunpack.c.l.s4 1983009808
      %v835 = vunpack.c.0.s8 %v834
      %v836 = vperm.slane %v828, %v835
      %v837 = vrot.slane %v824, 4
      %v838 = vsel %vm198, %v837, %v822
      %v839 = vrot.slane %v822, 4
      %v840 = vsel %vm198, %v824, %v839
      %v842 = vunpack.c.l.s4 1983009808
      %v843 = vunpack.c.0.s8 %v842
      %v844 = vperm.slane %v838, %v843
      %v846 = vunpack.c.l.s4 1983009808
      %v847 = vunpack.c.0.s8 %v846
      %v848 = vperm.slane %v840, %v847
      %v849 = vrot.slane %v844, 4
      %v850 = vsel %vm198, %v849, %v832
      %v851 = vrot.slane %v832, 4
      %v852 = vsel %vm198, %v844, %v851
      %v854 = vunpack.c.l.s4 1934713408
      %v855 = vunpack.c.0.s8 %v854
      %v856 = vperm.slane %v850, %v855
      %v858 = vunpack.c.l.s4 1934713408
      %v859 = vunpack.c.0.s8 %v858
      %v860 = vperm.slane %v852, %v859
      %v861 = vrot.slane %v848, 4
      %v862 = vsel %vm198, %v861, %v836
      %v863 = vrot.slane %v836, 4
      %v864 = vsel %vm198, %v848, %v863
      %v866 = vunpack.c.l.s4 1934713408
      %v867 = vunpack.c.0.s8 %v866
      %v868 = vperm.slane %v862, %v867
      %v870 = vunpack.c.l.s4 1934713408
      %v871 = vunpack.c.0.s8 %v870
      %v872 = vperm.slane %v864, %v871
      %v873 = vrot.slane %v856, 4
      %v874 = vsel %vm198, 0.0, %v873
      %v875 = vrot.slane %v860, 4
      %v876 = vsel %vm198, 0.0, %v875
      %v877 = vrot.slane %v868, 4
      %v878 = vsel %vm198, 0.0, %v877
      %v879 = vrot.slane %v872, 4
      %v880 = vsel %vm198, 0.0, %v879
      %882 = vrot.lane.b32.xlu0 %v874, 16
      %v883 = vpop.permute.xlu0 %882
      %886 = vrot.lane.b32.xlu0 %v860, 32
      %v887 = vpop.permute.xlu0 %886
      %890 = vrot.lane.b32.xlu0 %v876, 48
      %v891 = vpop.permute.xlu0 %890
      %894 = vrot.lane.b32.xlu0 %v868, 64
      %v895 = vpop.permute.xlu0 %894
      %898 = vrot.lane.b32.xlu0 %v878, 80
      %v899 = vpop.permute.xlu0 %898
      %902 = vrot.lane.b32.xlu0 %v872, 96
      %v903 = vpop.permute.xlu0 %902
      %906 = vrot.lane.b32.xlu0 %v880, 112
      %v907 = vpop.permute.xlu0 %906
      %v909 = vsel %vm282, %v856, %v883
      %v910 = vsel %vm284, %v909, %v887
      %v911 = vsel %vm286, %v910, %v891
      %v912 = vsel %vm288, %v911, %v895
      %v913 = vsel %vm290, %v912, %v899
      %v914 = vsel %vm292, %v913, %v903
      %v915 = vsel %vm294, %v914, %v907
      %916 = vst [vmem:[#allocation2 + $0x18] sm:$0xf] %v915
      %921 = vrot.lane.b32.xlu0 %v821, 127
      %v922 = vpop.permute.xlu0 %921
      %923 = vrot.lane.b32.xlu0 %v822, 127
      %v924 = vpop.permute.xlu0 %923
      %925 = vrot.lane.b32.xlu0 %v823, 127
      %v926 = vpop.permute.xlu0 %925
      %927 = vrot.lane.b32.xlu0 %v824, 127
      %v928 = vpop.permute.xlu0 %927
      %v933 = vrot.slane %v926, 4
      %v934 = vsel %vm198, %v933, %v922
      %v935 = vrot.slane %v922, 4
      %v936 = vsel %vm198, %v926, %v935
      %v938 = vunpack.c.l.s4 1983009808
      %v939 = vunpack.c.0.s8 %v938
      %v940 = vperm.slane %v934, %v939
      %v942 = vunpack.c.l.s4 1983009808
      %v943 = vunpack.c.0.s8 %v942
      %v944 = vperm.slane %v936, %v943
      %v945 = vrot.slane %v928, 4
      %v946 = vsel %vm198, %v945, %v924
      %v947 = vrot.slane %v924, 4
      %v948 = vsel %vm198, %v928, %v947
      %v950 = vunpack.c.l.s4 1983009808
      %v951 = vunpack.c.0.s8 %v950
      %v952 = vperm.slane %v946, %v951
      %v954 = vunpack.c.l.s4 1983009808
      %v955 = vunpack.c.0.s8 %v954
      %v956 = vperm.slane %v948, %v955
      %v957 = vrot.slane %v952, 4
      %v958 = vsel %vm198, %v957, %v940
      %v959 = vrot.slane %v940, 4
      %v960 = vsel %vm198, %v952, %v959
      %v962 = vunpack.c.l.s4 1934713408
      %v963 = vunpack.c.0.s8 %v962
      %v964 = vperm.slane %v958, %v963
      %v966 = vunpack.c.l.s4 1934713408
      %v967 = vunpack.c.0.s8 %v966
      %v968 = vperm.slane %v960, %v967
      %v969 = vrot.slane %v956, 4
      %v970 = vsel %vm198, %v969, %v944
      %v971 = vrot.slane %v944, 4
      %v972 = vsel %vm198, %v956, %v971
      %v974 = vunpack.c.l.s4 1934713408
      %v975 = vunpack.c.0.s8 %v974
      %v976 = vperm.slane %v970, %v975
      %v978 = vunpack.c.l.s4 1934713408
      %v979 = vunpack.c.0.s8 %v978
      %v980 = vperm.slane %v972, %v979
      %v981 = vrot.slane %v964, 4
      %v982 = vsel %vm198, 0.0, %v981
      %v983 = vrot.slane %v968, 4
      %v984 = vsel %vm198, 0.0, %v983
      %v985 = vrot.slane %v976, 4
      %v986 = vsel %vm198, 0.0, %v985
      %v987 = vrot.slane %v980, 4
      %v988 = vsel %vm198, 0.0, %v987
      %990 = vrot.lane.b32.xlu0 %v982, 16
      %v991 = vpop.permute.xlu0 %990
      %994 = vrot.lane.b32.xlu0 %v968, 32
      %v995 = vpop.permute.xlu0 %994
      %998 = vrot.lane.b32.xlu0 %v984, 48
      %v999 = vpop.permute.xlu0 %998
      %1002 = vrot.lane.b32.xlu0 %v976, 64
      %v1003 = vpop.permute.xlu0 %1002
      %1006 = vrot.lane.b32.xlu0 %v986, 80
      %v1007 = vpop.permute.xlu0 %1006
      %1010 = vrot.lane.b32.xlu0 %v980, 96
      %v1011 = vpop.permute.xlu0 %1010
      %1014 = vrot.lane.b32.xlu0 %v988, 112
      %v1015 = vpop.permute.xlu0 %1014
      %v1017 = vsel %vm282, %v964, %v991
      %v1018 = vsel %vm284, %v1017, %v995
      %v1019 = vsel %vm286, %v1018, %v999
      %v1020 = vsel %vm288, %v1019, %v1003
      %v1021 = vsel %vm290, %v1020, %v1007
      %v1022 = vsel %vm292, %v1021, %v1011
      %v1023 = vsel %vm294, %v1022, %v1015
      %1024 = vst [vmem:[#allocation2 + $0x1c] sm:$0xf] %v1023
      %1025 = vrot.lane.b32.xlu0 %v821, 126
      %v1026 = vpop.permute.xlu0 %1025
      %1027 = vrot.lane.b32.xlu0 %v822, 126
      %v1028 = vpop.permute.xlu0 %1027
      %1029 = vrot.lane.b32.xlu0 %v823, 126
      %v1030 = vpop.permute.xlu0 %1029
      %1031 = vrot.lane.b32.xlu0 %v824, 126
      %v1032 = vpop.permute.xlu0 %1031
      %v1037 = vrot.slane %v1030, 4
      %v1038 = vsel %vm198, %v1037, %v1026
      %v1039 = vrot.slane %v1026, 4
      %v1040 = vsel %vm198, %v1030, %v1039
      %v1042 = vunpack.c.l.s4 1983009808
      %v1043 = vunpack.c.0.s8 %v1042
      %v1044 = vperm.slane %v1038, %v1043
      %v1046 = vunpack.c.l.s4 1983009808
      %v1047 = vunpack.c.0.s8 %v1046
      %v1048 = vperm.slane %v1040, %v1047
      %v1049 = vrot.slane %v1032, 4
      %v1050 = vsel %vm198, %v1049, %v1028
      %v1051 = vrot.slane %v1028, 4
      %v1052 = vsel %vm198, %v1032, %v1051
      %v1054 = vunpack.c.l.s4 1983009808
      %v1055 = vunpack.c.0.s8 %v1054
      %v1056 = vperm.slane %v1050, %v1055
      %v1058 = vunpack.c.l.s4 1983009808
      %v1059 = vunpack.c.0.s8 %v1058
      %v1060 = vperm.slane %v1052, %v1059
      %v1061 = vrot.slane %v1056, 4
      %v1062 = vsel %vm198, %v1061, %v1044
      %v1063 = vrot.slane %v1044, 4
      %v1064 = vsel %vm198, %v1056, %v1063
      %v1066 = vunpack.c.l.s4 1934713408
      %v1067 = vunpack.c.0.s8 %v1066
      %v1068 = vperm.slane %v1062, %v1067
      %v1070 = vunpack.c.l.s4 1934713408
      %v1071 = vunpack.c.0.s8 %v1070
      %v1072 = vperm.slane %v1064, %v1071
      %v1073 = vrot.slane %v1060, 4
      %v1074 = vsel %vm198, %v1073, %v1048
      %v1075 = vrot.slane %v1048, 4
      %v1076 = vsel %vm198, %v1060, %v1075
      %v1078 = vunpack.c.l.s4 1934713408
      %v1079 = vunpack.c.0.s8 %v1078
      %v1080 = vperm.slane %v1074, %v1079
      %v1082 = vunpack.c.l.s4 1934713408
      %v1083 = vunpack.c.0.s8 %v1082
      %v1084 = vperm.slane %v1076, %v1083
      %v1085 = vrot.slane %v1068, 4
      %v1086 = vsel %vm198, 0.0, %v1085
      %v1087 = vrot.slane %v1072, 4
      %v1088 = vsel %vm198, 0.0, %v1087
      %v1089 = vrot.slane %v1080, 4
      %v1090 = vsel %vm198, 0.0, %v1089
      %v1091 = vrot.slane %v1084, 4
      %v1092 = vsel %vm198, 0.0, %v1091
      %1094 = vrot.lane.b32.xlu0 %v1086, 16
      %v1095 = vpop.permute.xlu0 %1094
      %1098 = vrot.lane.b32.xlu0 %v1072, 32
      %v1099 = vpop.permute.xlu0 %1098
      %1102 = vrot.lane.b32.xlu0 %v1088, 48
      %v1103 = vpop.permute.xlu0 %1102
      %1106 = vrot.lane.b32.xlu0 %v1080, 64
      %v1107 = vpop.permute.xlu0 %1106
      %1110 = vrot.lane.b32.xlu0 %v1090, 80
      %v1111 = vpop.permute.xlu0 %1110
      %1114 = vrot.lane.b32.xlu0 %v1084, 96
      %v1115 = vpop.permute.xlu0 %1114
      %1118 = vrot.lane.b32.xlu0 %v1092, 112
      %v1119 = vpop.permute.xlu0 %1118
      %v1121 = vsel %vm282, %v1068, %v1095
      %v1122 = vsel %vm284, %v1121, %v1099
      %v1123 = vsel %vm286, %v1122, %v1103
      %v1124 = vsel %vm288, %v1123, %v1107
      %v1125 = vsel %vm290, %v1124, %v1111
      %v1126 = vsel %vm292, %v1125, %v1115
      %v1127 = vsel %vm294, %v1126, %v1119
      %1128 = vst [vmem:[#allocation2 + $0x20] sm:$0xf] %v1127
      %v1129 = vld [vmem:[%s1] sm:$0xff]
      %v1130 = vld [vmem:[#allocation2] sm:$0xff]
      %v1131 = vld [vmem:[#allocation2 + $0x8] sm:$0xff]
      %v1132 = vld [vmem:[#allocation2 + $0x10] sm:$0xff]
      %v1133 = vld [vmem:[#allocation2 + $0x18] sm:$0xff]
      %v1134 = vld [vmem:[#allocation2 + $0x20] sm:$0xf]
      %v1135 = vld [vmem:[%s2] sm:$0xff]
      %1137 = vset.pattern.permute.xlu0 0
      %1138 = vperm.xlu0 %1137, %v1135
      %v1139 = vpop.permute.xlu0 %1138
      %vm1141 = vcmask 293888
      %v1143 = vsel %vm1141, %v1129, 0
      %vm1145 = vcmask 1043456
      %v1147 = vsel %vm1145, %v1134, 0
      %1149 = vmatpush.msra.mxu0 0.0
      %1150 = vmatpush.msra.mxu0 0.0
      %1151 = vmatpush.msra.mxu0 0.0
      %1152 = vmatpush.msra.mxu0 0.0
      %1153 = vmatpush.msra.mxu0 0.0
      %1154 = vmatpush.msra.mxu0 0.0
      %1155 = vmatpush.msra.mxu0 0.0
      %1156 = vmatpush.msra.mxu0 0.0
      %1157 = vmatpush.msra.mxu0 0.0
      %1158 = vmatpush.msra.mxu0 0.0
      %1159 = vmatpush.msra.mxu0 0.0
      %1160 = vmatpush.msra.mxu0 %v1147
      %1161 = vmatpush.msra.mxu0 %v1133
      %1162 = vmatpush.msra.mxu0 %v1132
      %1163 = vmatpush.msra.mxu0 %v1131
      %1164 = vmatpush.msra.mxu0 %v1130
      %1165 = vmatmul.f32.gmra.mxu0 %v1143
      %v1166 = vpop.f32.mrf.mxu0
      %v1167 = vadd.f32 %v1139, %v1166
      %1168 = vdwg.mxu0
      %1169 = vst [vmem:[%s190] sm:$0xff] %v1167
      %p1170 = scmp.lt.s32.totalorder %s18, 1
      %s1171 = scalar_select %p1170, %s18, 1
      %p1172 = scmp.lt.s32.totalorder %s19, 1
      %s1173 = scalar_select %p1172, %s19, 1
      %s1174 = smul.addr %s1171, 2
      %s1175 = sadd.s32 %s1173, %s1174
      %s1176 = smul.addr %s1175, 8
      %s1177 = scalar_lea.vmem %s3, %s1176
      // Predicated region
      $region33: #{wn_conv2d.1} parent=31 // pred_check
        %p1178 = pneg %p114
      $region34: #{wn_conv2d.1} parent=31 // pred_check_branch
        %1180 = sbr.rel (%p1178) target = $region36
      $region35: #{wn_conv2d.1} parent=31 // pred_region
        _
      $region36: #{wn_conv2d.1} parent=31 // pred_fallthru
        _
    $region32: #{wn_conv2d.1} parent=5 // pred_fallthru
      _
    %p1181 = scmp.le.s32.totalorder 2, %s9
    // Predicated region
    $region37: #{wn_conv2d.1} parent=5 // pred_check
      %p1182 = pneg %p1181
    $region38: #{wn_conv2d.1} parent=5 // pred_check_branch
      %1184 = sbr.rel (%p1182) target = $region40
    $region39: #{wn_conv2d.1} parent=5 // pred_region
      %s1185 = ssub.s32 %s9, 2
      // Predicated region
      $region41: #{wn_conv2d.1} parent=39 // pred_check
        %p1186 = pneg %p120
      $region42: #{wn_conv2d.1} parent=39 // pred_check_branch
        %1188 = sbr.rel (%p1186) target = $region44
      $region43: #{wn_conv2d.1} parent=39 // pred_region
        %p1189 = scmp.lt.s32.totalorder %s20, 1
        %s1190 = scalar_select %p1189, %s20, 1
        %p1191 = scmp.lt.s32.totalorder %s21, 1
        %s1192 = scalar_select %p1191, %s21, 1
        %s1193 = smul.addr %s1190, 2
        %s1194 = sadd.s32 %s1192, %s1193
        %s1195 = smul.addr %s1194, 8
        %s1196 = scalar_lea.vmem %s3, %s1195
      $region44: #{wn_conv2d.1} parent=39 // pred_fallthru
        _
    $region40: #{wn_conv2d.1} parent=5 // pred_fallthru
      _
  $region6: #{wn_conv2d.1} parent=0 // loop_footer
    %s13 = sadd.s32 1, %s9
  $region7: #{wn_conv2d.1} parent=0 // loop_footer_branch
    %8 = sbr.rel target = $region3
  $region8: #{wn_conv2d.1} parent=0 // loop_exit
    _

</llo_original>
